<compile_context>
chip_gen: v5e
topology: v5e:2x2
jax: 0.10.0
libtpu: 0.0.40
codegen_flags: <defaults>
</compile_context>

<pallas_src>
import functools

import jax
import jax.numpy as jnp
from jax.experimental import pallas as pl
from jax.experimental.pallas import tpu as pltpu


def _outconv_kernel(x_ref, w_ref, b_ref, o_ref):
    # x_ref: (C_in, TP) VMEM block of activations (spatial last, lane-dense)
    # w_ref: (C_out, C_in) SMEM   b_ref: (C_out,) SMEM
    # o_ref: (C_out, TP) VMEM output block (spatial last, lane-dense)
    c_out, c_in = w_ref.shape
    x = x_ref[...].astype(jnp.float32)                 # (C_in, TP)
    # Unrolled VPU FMA over channels; MXU deliberately skipped (C_in/C_out tiny).
    # TODO(synk): switch to an MXU jnp.dot path if C_in*C_out ever grows large.
    for co in range(c_out):
        acc = w_ref[co, 0] * x[0:1, :]                 # (1, TP) f32
        for ci in range(1, c_in):
            acc = acc + w_ref[co, ci] * x[ci:ci + 1, :]
        o_ref[co:co + 1, :] = (acc + b_ref[co]).astype(o_ref.dtype)


@functools.partial(jax.jit, static_argnames=("max_tile",))
def out_conv(x_nchw, weight, bias, *, max_tile=4096):
    """1x1 conv, identical semantics to nn.Conv2d(C_in, num_classes, kernel_size=1).

    x_nchw : (N, C_in, H, W)
    weight : (C_out, C_in)   (PyTorch conv weight squeezed over the 1x1 kernel)
    bias   : (C_out,)
    returns: (N, C_out, H, W)
    """
    N, C_in, H, W = x_nchw.shape
    C_out = weight.shape[0]
    HW = H * W

    # Free reshape — no transpose, no HBM copy.
    x3 = x_nchw.reshape(N, C_in, HW)

    # Lane-aligned spatial tile, capped so double-buffered in/out blocks stay
    # well under every generation's scoped VMEM budget (v5e 16MiB default,
    # v7x 64MiB physical): f32 blocks at tile_p=4096 are ~64KB in / ~128KB out.
    tile_p = min(pl.cdiv(HW, 128) * 128, max_tile)
    grid = (N, pl.cdiv(HW, tile_p))

    w = weight.astype(jnp.float32)
    b = bias.astype(jnp.float32)

    out = pl.pallas_call(
        _outconv_kernel,
        out_shape=jax.ShapeDtypeStruct((N, C_out, HW), x_nchw.dtype),
        grid_spec=pltpu.PrefetchScalarGridSpec(
            num_scalar_prefetch=0,
            grid=grid,
            in_specs=[
                # batch dim squeezed; block = (C_in, tile_p), lane-dense.
                pl.BlockSpec((None, C_in, tile_p), lambda n, p: (n, 0, p)),
                # tiny weight / bias live in SMEM for scalar reads.
                pl.BlockSpec(memory_space=pltpu.MemorySpace.SMEM),
                pl.BlockSpec(memory_space=pltpu.MemorySpace.SMEM),
            ],
            out_specs=pl.BlockSpec((None, C_out, tile_p), lambda n, p: (n, 0, p)),
        ),
        compiler_params=pltpu.CompilerParams(
            dimension_semantics=("parallel", "parallel")),
    )(x3, w, b)

    return out.reshape(N, C_out, H, W)


if __name__ == "__main__":
    # Small deterministic example consistent with OutConv(in_channels=4, num_classes=3)
    N, C_in, H, W = 2, 4, 16, 16
    C_out = 3

    key = jax.random.PRNGKey(0)
    kx, kw, kb = jax.random.split(key, 3)

    x = jax.random.normal(kx, (N, C_in, H, W), dtype=jnp.float32)
    # PyTorch shapes: weight (C_out, C_in, 1, 1) squeezed -> (C_out, C_in), bias (C_out,)
    weight = jax.random.normal(kw, (C_out, C_in), dtype=jnp.float32) * 0.1
    bias = jax.random.normal(kb, (C_out,), dtype=jnp.float32) * 0.1

    y = out_conv(x, weight, bias)
    y = jax.block_until_ready(y)

    # reference: plain-JAX 1x1 conv (einsum over channel axis)
    y_ref = jnp.einsum("nchw,oc->nohw", x, weight) + bias[None, :, None, None]
    assert y.shape == (N, C_out, H, W), y.shape
    assert jnp.allclose(y, y_ref, atol=1e-5, rtol=1e-5), float(jnp.max(jnp.abs(y - y_ref)))

    print("KERNEL_OK")
</pallas_src>

<mosaic_0001>
module attributes {stable_mosaic.version = 11 : i64} {
  func.func @_outconv_kernel(%arg0: i32, %arg1: i32, %arg2: memref<1x4x256xf32, #tpu.memory_space<vmem>>, %arg3: memref<3x4xf32, #tpu.memory_space<smem>>, %arg4: memref<3xf32, #tpu.memory_space<smem>>, %arg5: memref<1x3x256xf32, #tpu.memory_space<vmem>>) attributes {dimension_semantics = [#tpu.dimension_semantics<parallel>, #tpu.dimension_semantics<parallel>], iteration_bounds = array<i64: 2, 1>, scalar_prefetch = 0 : i64, scratch_operands = 0 : i64, tpu.core_type = #tpu.core_type<tc>, window_params = [{transform_indices = @transform_0, window_bounds = array<i64: 1, 4, 256>}, {transform_indices = @transform_1, window_bounds = array<i64: 3, 4>}, {transform_indices = @transform_2, window_bounds = array<i64: 3>}, {transform_indices = @transform_3, window_bounds = array<i64: 1, 3, 256>}]} {
    %c0 = arith.constant 0 : index
    %c0_0 = arith.constant 0 : index
    %c0_1 = arith.constant 0 : index
    %0 = vector.load %arg2[%c0, %c0_0, %c0_1] : memref<1x4x256xf32, #tpu.memory_space<vmem>>, vector<1x4x256xf32>
    %1 = vector.shape_cast %0 : vector<1x4x256xf32> to vector<4x256xf32>
    %c0_2 = arith.constant 0 : index
    %c0_3 = arith.constant 0 : index
    %2 = memref.load %arg3[%c0_2, %c0_3] : memref<3x4xf32, #tpu.memory_space<smem>>
    %3 = vector.extract_strided_slice %1 {offsets = [0, 0], sizes = [1, 256], strides = [1, 1]} : vector<4x256xf32> to vector<1x256xf32>
    %4 = vector.broadcast %2 : f32 to vector<1x256xf32>
    %5 = arith.mulf %4, %3 : vector<1x256xf32>
    %c0_4 = arith.constant 0 : index
    %c1 = arith.constant 1 : index
    %6 = memref.load %arg3[%c0_4, %c1] : memref<3x4xf32, #tpu.memory_space<smem>>
    %7 = vector.extract_strided_slice %1 {offsets = [1, 0], sizes = [1, 256], strides = [1, 1]} : vector<4x256xf32> to vector<1x256xf32>
    %8 = vector.broadcast %6 : f32 to vector<1x256xf32>
    %9 = arith.mulf %8, %7 : vector<1x256xf32>
    %10 = arith.addf %5, %9 : vector<1x256xf32>
    %c0_5 = arith.constant 0 : index
    %c2 = arith.constant 2 : index
    %11 = memref.load %arg3[%c0_5, %c2] : memref<3x4xf32, #tpu.memory_space<smem>>
    %12 = vector.extract_strided_slice %1 {offsets = [2, 0], sizes = [1, 256], strides = [1, 1]} : vector<4x256xf32> to vector<1x256xf32>
    %13 = vector.broadcast %11 : f32 to vector<1x256xf32>
    %14 = arith.mulf %13, %12 : vector<1x256xf32>
    %15 = arith.addf %10, %14 : vector<1x256xf32>
    %c0_6 = arith.constant 0 : index
    %c3 = arith.constant 3 : index
    %16 = memref.load %arg3[%c0_6, %c3] : memref<3x4xf32, #tpu.memory_space<smem>>
    %17 = vector.extract_strided_slice %1 {offsets = [3, 0], sizes = [1, 256], strides = [1, 1]} : vector<4x256xf32> to vector<1x256xf32>
    %18 = vector.broadcast %16 : f32 to vector<1x256xf32>
    %19 = arith.mulf %18, %17 : vector<1x256xf32>
    %20 = arith.addf %15, %19 : vector<1x256xf32>
    %c0_7 = arith.constant 0 : index
    %21 = memref.load %arg4[%c0_7] : memref<3xf32, #tpu.memory_space<smem>>
    %22 = vector.broadcast %21 : f32 to vector<1x256xf32>
    %23 = arith.addf %20, %22 : vector<1x256xf32>
    %c0_8 = arith.constant 0 : index
    %c0_9 = arith.constant 0 : index
    %c0_10 = arith.constant 0 : index
    %24 = vector.load %arg5[%c0_8, %c0_9, %c0_10] : memref<1x3x256xf32, #tpu.memory_space<vmem>>, vector<1x1x256xf32>
    %25 = vector.shape_cast %24 : vector<1x1x256xf32> to vector<1x256xf32>
    %26 = vector.shape_cast %23 : vector<1x256xf32> to vector<1x1x256xf32>
    tpu.vector_store %arg5[%c0_8, %c0_9, %c0_10], %26 {strides = array<i32>} : memref<1x3x256xf32, #tpu.memory_space<vmem>>, vector<1x1x256xf32>,
    %c1_11 = arith.constant 1 : index
    %c0_12 = arith.constant 0 : index
    %27 = memref.load %arg3[%c1_11, %c0_12] : memref<3x4xf32, #tpu.memory_space<smem>>
    %28 = vector.extract_strided_slice %1 {offsets = [0, 0], sizes = [1, 256], strides = [1, 1]} : vector<4x256xf32> to vector<1x256xf32>
    %29 = vector.broadcast %27 : f32 to vector<1x256xf32>
    %30 = arith.mulf %29, %28 : vector<1x256xf32>
    %c1_13 = arith.constant 1 : index
    %c1_14 = arith.constant 1 : index
    %31 = memref.load %arg3[%c1_13, %c1_14] : memref<3x4xf32, #tpu.memory_space<smem>>
    %32 = vector.extract_strided_slice %1 {offsets = [1, 0], sizes = [1, 256], strides = [1, 1]} : vector<4x256xf32> to vector<1x256xf32>
    %33 = vector.broadcast %31 : f32 to vector<1x256xf32>
    %34 = arith.mulf %33, %32 : vector<1x256xf32>
    %35 = arith.addf %30, %34 : vector<1x256xf32>
    %c1_15 = arith.constant 1 : index
    %c2_16 = arith.constant 2 : index
    %36 = memref.load %arg3[%c1_15, %c2_16] : memref<3x4xf32, #tpu.memory_space<smem>>
    %37 = vector.extract_strided_slice %1 {offsets = [2, 0], sizes = [1, 256], strides = [1, 1]} : vector<4x256xf32> to vector<1x256xf32>
    %38 = vector.broadcast %36 : f32 to vector<1x256xf32>
    %39 = arith.mulf %38, %37 : vector<1x256xf32>
    %40 = arith.addf %35, %39 : vector<1x256xf32>
    %c1_17 = arith.constant 1 : index
    %c3_18 = arith.constant 3 : index
    %41 = memref.load %arg3[%c1_17, %c3_18] : memref<3x4xf32, #tpu.memory_space<smem>>
    %42 = vector.extract_strided_slice %1 {offsets = [3, 0], sizes = [1, 256], strides = [1, 1]} : vector<4x256xf32> to vector<1x256xf32>
    %43 = vector.broadcast %41 : f32 to vector<1x256xf32>
    %44 = arith.mulf %43, %42 : vector<1x256xf32>
    %45 = arith.addf %40, %44 : vector<1x256xf32>
    %c1_19 = arith.constant 1 : index
    %46 = memref.load %arg4[%c1_19] : memref<3xf32, #tpu.memory_space<smem>>
    %47 = vector.broadcast %46 : f32 to vector<1x256xf32>
    %48 = arith.addf %45, %47 : vector<1x256xf32>
    %c0_20 = arith.constant 0 : index
    %c1_21 = arith.constant 1 : index
    %c0_22 = arith.constant 0 : index
    %49 = vector.load %arg5[%c0_20, %c1_21, %c0_22] : memref<1x3x256xf32, #tpu.memory_space<vmem>>, vector<1x1x256xf32>
    %50 = vector.shape_cast %49 : vector<1x1x256xf32> to vector<1x256xf32>
    %51 = vector.shape_cast %48 : vector<1x256xf32> to vector<1x1x256xf32>
    tpu.vector_store %arg5[%c0_20, %c1_21, %c0_22], %51 {strides = array<i32>} : memref<1x3x256xf32, #tpu.memory_space<vmem>>, vector<1x1x256xf32>,
    %c2_23 = arith.constant 2 : index
    %c0_24 = arith.constant 0 : index
    %52 = memref.load %arg3[%c2_23, %c0_24] : memref<3x4xf32, #tpu.memory_space<smem>>
    %53 = vector.extract_strided_slice %1 {offsets = [0, 0], sizes = [1, 256], strides = [1, 1]} : vector<4x256xf32> to vector<1x256xf32>
    %54 = vector.broadcast %52 : f32 to vector<1x256xf32>
    %55 = arith.mulf %54, %53 : vector<1x256xf32>
    %c2_25 = arith.constant 2 : index
    %c1_26 = arith.constant 1 : index
    %56 = memref.load %arg3[%c2_25, %c1_26] : memref<3x4xf32, #tpu.memory_space<smem>>
    %57 = vector.extract_strided_slice %1 {offsets = [1, 0], sizes = [1, 256], strides = [1, 1]} : vector<4x256xf32> to vector<1x256xf32>
    %58 = vector.broadcast %56 : f32 to vector<1x256xf32>
    %59 = arith.mulf %58, %57 : vector<1x256xf32>
    %60 = arith.addf %55, %59 : vector<1x256xf32>
    %c2_27 = arith.constant 2 : index
    %c2_28 = arith.constant 2 : index
    %61 = memref.load %arg3[%c2_27, %c2_28] : memref<3x4xf32, #tpu.memory_space<smem>>
    %62 = vector.extract_strided_slice %1 {offsets = [2, 0], sizes = [1, 256], strides = [1, 1]} : vector<4x256xf32> to vector<1x256xf32>
    %63 = vector.broadcast %61 : f32 to vector<1x256xf32>
    %64 = arith.mulf %63, %62 : vector<1x256xf32>
    %65 = arith.addf %60, %64 : vector<1x256xf32>
    %c2_29 = arith.constant 2 : index
    %c3_30 = arith.constant 3 : index
    %66 = memref.load %arg3[%c2_29, %c3_30] : memref<3x4xf32, #tpu.memory_space<smem>>
    %67 = vector.extract_strided_slice %1 {offsets = [3, 0], sizes = [1, 256], strides = [1, 1]} : vector<4x256xf32> to vector<1x256xf32>
    %68 = vector.broadcast %66 : f32 to vector<1x256xf32>
    %69 = arith.mulf %68, %67 : vector<1x256xf32>
    %70 = arith.addf %65, %69 : vector<1x256xf32>
    %c2_31 = arith.constant 2 : index
    %71 = memref.load %arg4[%c2_31] : memref<3xf32, #tpu.memory_space<smem>>
    %72 = vector.broadcast %71 : f32 to vector<1x256xf32>
    %73 = arith.addf %70, %72 : vector<1x256xf32>
    %c0_32 = arith.constant 0 : index
    %c2_33 = arith.constant 2 : index
    %c0_34 = arith.constant 0 : index
    %74 = vector.load %arg5[%c0_32, %c2_33, %c0_34] : memref<1x3x256xf32, #tpu.memory_space<vmem>>, vector<1x1x256xf32>
    %75 = vector.shape_cast %74 : vector<1x1x256xf32> to vector<1x256xf32>
    %76 = vector.shape_cast %73 : vector<1x256xf32> to vector<1x1x256xf32>
    tpu.vector_store %arg5[%c0_32, %c2_33, %c0_34], %76 {strides = array<i32>} : memref<1x3x256xf32, #tpu.memory_space<vmem>>, vector<1x1x256xf32>,
    return
  }
  func.func @transform_0(%arg0: i32, %arg1: i32) -> (i32, i32, i32) {
    %c0_i32 = arith.constant 0 : i32
    %c0_i32_0 = arith.constant 0 : i32
    return %arg0, %c0_i32, %arg1 : i32, i32, i32
  }
  func.func @transform_1(%arg0: i32, %arg1: i32) -> (i32, i32) {
    %c0_i32 = arith.constant 0 : i32
    %c0_i32_0 = arith.constant 0 : i32
    %c0_i32_1 = arith.constant 0 : i32
    return %c0_i32, %c0_i32_0 : i32, i32
  }
  func.func @transform_2(%arg0: i32, %arg1: i32) -> i32 {
    %c0_i32 = arith.constant 0 : i32
    %c0_i32_0 = arith.constant 0 : i32
    return %c0_i32 : i32
  }
  func.func @transform_3(%arg0: i32, %arg1: i32) -> (i32, i32, i32) {
    %c0_i32 = arith.constant 0 : i32
    %c0_i32_0 = arith.constant 0 : i32
    return %arg0, %c0_i32, %arg1 : i32, i32, i32
  }
}

</mosaic_0001>

<llo_original>
// kernel: out_conv.1
$region0: #{out_conv.1}
  #allocation0 [shape = 'u32[]', space=smem, size = 0x4, offset = 0x4, fixed_abs, tag = 'smem constant byte address 0x4 - core index']
  #allocation1 [shape = 'u32[72,128]{1,0:T(1,128)}', space=vmem, size = 0x9000, scoped, tag = 'internal scratch']
  %s0 = inlined_call_operand.vmem [shape: f32[2,4,256], index: 0, kind: input, shape index: {}]
  %s1 = inlined_call_operand.vmem [shape: f32[3,4], index: 1, kind: input, shape index: {}]
  %s2 = inlined_call_operand.vmem [shape: f32[3], index: 2, kind: input, shape index: {}]
  %s3 = inlined_call_operand.vmem [shape: f32[2,3,256], index: 3, kind: output, shape index: {}]
  %s4 = sld [smem:[#allocation0]]
  $region53: #{out_conv.1} parent=0
    _
  %s6 = ssub.s32 1, %s4
  %s7 = scalar_select 0, %s6, %s4
  $region1: #{out_conv.1} parent=0
    #allocation2 [shape = 'u8[2048]{0}', space=smem, size = 0x800, scoped, tag = 'input window, operand 1, single buffered']
    #allocation3 [shape = 's32[2]{0}', space=sflag, size = 0x8, scoped, tag = 'scoped memory for out_conv.1']
    #allocation4 [shape = 'u8[512]{0}', space=smem, size = 0x200, scoped, tag = 'input window, operand 2, single buffered']
    #allocation5 [shape = 's32[1]{0}', space=sflag, size = 0x4, scoped, tag = 'scoped memory for out_conv.1']
    %8 = vsyncpa [#allocation3], 0
    %9 = vsyncpa [#allocation5], 0
    loop: start=0, step=1, limit=4
    $region2: #{out_conv.1} parent=1 // loop_pre_header
      _
    $region3: #{out_conv.1} parent=1 // loop_header
      %s11 = sphi 0, %s15
      %p12 = scmp.ge.s32.totalorder %s11, 4
      %s18 = sphi 0, %s30
      %s19 = sphi 0, %s26
      %s20 = sphi 0, %s18
      %s21 = sphi 0, %s19
      %s22 = sphi 0, %s20
      %s23 = sphi 0, %s21
      %s35 = sphi 0, %s37
      %s38 = sphi 0, %s35
      %s39 = sphi 0, %s38
      %s55 = sphi 0, %s39
      %s59 = sphi 0, %s59
      %s61 = sphi 0, %s59
      %s62 = sphi 0, %s61
      %s76 = sphi 0, %s62
      %s80 = sphi 0, %s80
      %s82 = sphi 0, %s80
      %s83 = sphi 0, %s82
      %s97 = sphi 0, %s83
      %s105 = sphi 0, %s107
      %s108 = sphi 0, %s105
      %s109 = sphi 0, %s108
      %s125 = sphi 0, %s109
    $region4: #{out_conv.1} parent=1 // loop_header_branch
      %14 = sbr.rel (%p12) target = $region8
    $region5: #{out_conv.1} parent=1 // loop_body
      %s16 = ssub.s32 %s11, 1
      %s17 = ssub.s32 %s11, 2
      %s24 = sadd.s32 1, %s19
      %p25 = scmp.ge.s32.totalorder %s24, 1
      %s26 = scalar_select %p25, 0, %s24
      %s27 = sadd.s32 1, %s18
      %s28 = scalar_select %p25, %s27, %s18
      %p29 = scmp.ge.s32.totalorder %s28, 2
      %s30 = scalar_select %p29, 0, %s28
      %s31 = ssub.s32 %s18, %s30
      %s32 = ssub.s32 %s19, %s26
      %s33 = sor.u32 %s31, %s32
      %p34 = scmp.eq.s32.totalorder %s33, 0
      %s36 = sadd.s32 %s35, 1
      %s37 = scalar_select %p34, %s35, %s36
      %p40 = pneg %p34
      %p41 = scmp.eq.s32.totalorder %s11, 1
      %p42 = por %p40, %p41
      %p43 = scmp.ne.s32.totalorder %s35, %s38
      %p44 = scmp.eq.s32.totalorder %s11, 0
      %p45 = por %p43, %p44
      %p46 = scmp.ne.s32.totalorder %s35, %s38
      %p47 = scmp.eq.s32.totalorder %s16, 1
      %p48 = por %p46, %p47
      %p49 = scmp.ne.s32.totalorder %s38, %s39
      %p50 = scmp.eq.s32.totalorder %s16, 0
      %p51 = por %p49, %p50
      %p52 = scmp.ne.s32.totalorder %s38, %s39
      %p53 = scmp.eq.s32.totalorder %s17, 1
      %p54 = por %p52, %p53
      %p56 = scmp.ne.s32.totalorder %s39, %s55
      %p57 = scmp.eq.s32.totalorder %s17, 0
      %p58 = por %p56, %p57
      %s60 = sadd.s32 %s59, 1
      %p63 = scmp.eq.s32.totalorder %s11, 1
      %p64 = scmp.ne.s32.totalorder %s59, %s61
      %p65 = scmp.eq.s32.totalorder %s11, 0
      %p66 = por %p64, %p65
      %p67 = scmp.ne.s32.totalorder %s59, %s61
      %p68 = scmp.eq.s32.totalorder %s16, 1
      %p69 = por %p67, %p68
      %p70 = scmp.ne.s32.totalorder %s61, %s62
      %p71 = scmp.eq.s32.totalorder %s16, 0
      %p72 = por %p70, %p71
      %p73 = scmp.ne.s32.totalorder %s61, %s62
      %p74 = scmp.eq.s32.totalorder %s17, 1
      %p75 = por %p73, %p74
      %p77 = scmp.ne.s32.totalorder %s62, %s76
      %p78 = scmp.eq.s32.totalorder %s17, 0
      %p79 = por %p77, %p78
      %s81 = sadd.s32 %s80, 1
      %p84 = scmp.eq.s32.totalorder %s11, 1
      %p85 = scmp.ne.s32.totalorder %s80, %s82
      %p86 = scmp.eq.s32.totalorder %s11, 0
      %p87 = por %p85, %p86
      %p88 = scmp.ne.s32.totalorder %s80, %s82
      %p89 = scmp.eq.s32.totalorder %s16, 1
      %p90 = por %p88, %p89
      %p91 = scmp.ne.s32.totalorder %s82, %s83
      %p92 = scmp.eq.s32.totalorder %s16, 0
      %p93 = por %p91, %p92
      %p94 = scmp.ne.s32.totalorder %s82, %s83
      %p95 = scmp.eq.s32.totalorder %s17, 1
      %p96 = por %p94, %p95
      %p98 = scmp.ne.s32.totalorder %s83, %s97
      %p99 = scmp.eq.s32.totalorder %s17, 0
      %p100 = por %p98, %p99
      %s101 = ssub.s32 %s18, %s30
      %s102 = ssub.s32 %s19, %s26
      %s103 = sor.u32 %s101, %s102
      %p104 = scmp.eq.s32.totalorder %s103, 0
      %s106 = sadd.s32 %s105, 1
      %s107 = scalar_select %p104, %s105, %s106
      %p110 = pneg %p104
      %p111 = scmp.eq.s32.totalorder %s11, 1
      %p112 = por %p110, %p111
      %p113 = scmp.ne.s32.totalorder %s105, %s108
      %p114 = scmp.eq.s32.totalorder %s11, 0
      %p115 = por %p113, %p114
      %p116 = scmp.ne.s32.totalorder %s105, %s108
      %p117 = scmp.eq.s32.totalorder %s16, 1
      %p118 = por %p116, %p117
      %p119 = scmp.ne.s32.totalorder %s108, %s109
      %p120 = scmp.eq.s32.totalorder %s16, 0
      %p121 = por %p119, %p120
      %p122 = scmp.ne.s32.totalorder %s108, %s109
      %p123 = scmp.eq.s32.totalorder %s17, 1
      %p124 = por %p122, %p123
      %p126 = scmp.ne.s32.totalorder %s109, %s125
      %p127 = scmp.eq.s32.totalorder %s17, 0
      %p128 = por %p126, %p127
      %p129 = scmp.le.s32.totalorder 1, %s11
      %p130 = scmp.lt.s32.totalorder %s11, 3
      %p131 = pnand %p129, %p130
      %p132 = pneg %p131
      // Predicated region
      $region9: #{out_conv.1} parent=5 // pred_check
        _
      $region10: #{out_conv.1} parent=5 // pred_check_branch
        %134 = sbr.rel (%p131) target = $region12
      $region11: #{out_conv.1} parent=5 // pred_region
        %s135 = ssub.s32 %s11, 1
        // Predicated region
        $region13: #{out_conv.1} parent=11 // pred_check
          %p136 = pneg %p72
        $region14: #{out_conv.1} parent=11 // pred_check_branch
          %138 = sbr.rel (%p136) target = $region16
        $region15: #{out_conv.1} parent=11 // pred_region
          %140 = vsyncadd [#allocation3], 0
          %s142 = sshll.u32 %s1, 4
          %s143 = int_to_ptr.vmem [resolvable:$true] %s142
          %145 = dma.vmem_to_smem %s143, 64, [#allocation2], [#allocation3]
        $region16: #{out_conv.1} parent=11 // pred_fallthru
          _
        // Predicated region
        $region17: #{out_conv.1} parent=11 // pred_check
          %p146 = pneg %p93
        $region18: #{out_conv.1} parent=11 // pred_check_branch
          %148 = sbr.rel (%p146) target = $region20
        $region19: #{out_conv.1} parent=11 // pred_region
          %150 = vsyncadd [#allocation5], 0
          %s152 = sshll.u32 %s2, 4
          %s153 = int_to_ptr.vmem [resolvable:$true] %s152
          %155 = dma.vmem_to_smem %s153, 16, [#allocation4], [#allocation5]
        $region20: #{out_conv.1} parent=11 // pred_fallthru
          _
      $region12: #{out_conv.1} parent=5 // pred_fallthru
        _
      %p156 = scmp.lt.s32.totalorder %s11, 2
      // Predicated region
      $region21: #{out_conv.1} parent=5 // pred_check
        %p157 = pneg %p156
      $region22: #{out_conv.1} parent=5 // pred_check_branch
        %159 = sbr.rel (%p157) target = $region24
      $region23: #{out_conv.1} parent=5 // pred_region
        // Predicated region
        $region25: #{out_conv.1} parent=23 // pred_check
          %p160 = pneg %p45
        $region26: #{out_conv.1} parent=23 // pred_check_branch
          %162 = sbr.rel (%p160) target = $region28
        $region27: #{out_conv.1} parent=23 // pred_region
          %s163 = smul.u32 2, %s19
          %p164 = scmp.lt.s32.totalorder %s18, 1
          %s165 = scalar_select %p164, %s18, 1
          %p166 = scmp.lt.s32.totalorder %s163, 1
          %s167 = scalar_select %p166, %s163, 1
          %s168 = smul.addr %s165, 2
          %s169 = sadd.s32 %s167, %s168
          %s170 = smul.addr %s169, 4
          %s171 = scalar_lea.vmem %s0, %s170
          %s172 = smul.u32 2, %s19
        $region28: #{out_conv.1} parent=23 // pred_fallthru
          _
      $region24: #{out_conv.1} parent=5 // pred_fallthru
        _
      %p173 = scmp.le.s32.totalorder 1, %s11
      %p174 = scmp.lt.s32.totalorder %s11, 3
      %p175 = pnand %p173, %p174
      %p176 = pneg %p175
      // Predicated region
      $region29: #{out_conv.1} parent=5 // pred_check
        _
      $region30: #{out_conv.1} parent=5 // pred_check_branch
        %178 = sbr.rel (%p175) target = $region32
      $region31: #{out_conv.1} parent=5 // pred_region
        %s179 = ssub.s32 %s11, 1
        // Predicated region
        $region33: #{out_conv.1} parent=31 // pred_check
          %p180 = pneg %p72
        $region34: #{out_conv.1} parent=31 // pred_check_branch
          %182 = sbr.rel (%p180) target = $region36
        $region35: #{out_conv.1} parent=31 // pred_region
          %184 = dma.done [#allocation3], 64
        $region36: #{out_conv.1} parent=31 // pred_fallthru
          _
        // Predicated region
        $region37: #{out_conv.1} parent=31 // pred_check
          %p185 = pneg %p93
        $region38: #{out_conv.1} parent=31 // pred_check_branch
          %187 = sbr.rel (%p185) target = $region40
        $region39: #{out_conv.1} parent=31 // pred_region
          %189 = dma.done [#allocation5], 16
        $region40: #{out_conv.1} parent=31 // pred_fallthru
          _
        %190 = sfence
        %s191 = smul.u32 2, %s21
        %p192 = scmp.lt.s32.totalorder %s20, 1
        %s193 = scalar_select %p192, %s20, 1
        %p194 = scmp.lt.s32.totalorder %s191, 1
        %s195 = scalar_select %p194, %s191, 1
        %s196 = smul.addr %s193, 2
        %s197 = sadd.s32 %s195, %s196
        %s198 = smul.addr %s197, 4
        %s199 = scalar_lea.vmem %s0, %s198
        %p200 = pneg %p51
        %p201 = pneg %p48
        %p202 = pneg %p72
        %p203 = pneg %p69
        %p204 = pneg %p93
        %p205 = pneg %p90
        %p206 = pneg %p121
        %p207 = pneg %p118
        %s208 = smul.u32 2, %s21
        %p209 = scmp.lt.s32.totalorder %s20, 1
        %s210 = scalar_select %p209, %s20, 1
        %p211 = scmp.lt.s32.totalorder %s208, 1
        %s212 = scalar_select %p211, %s208, 1
        %s213 = smul.addr %s210, 2
        %s214 = sadd.s32 %s212, %s213
        %s215 = smul.addr %s214, 4
        %s216 = scalar_lea.vmem %s3, %s215
        %s217 = smul.u32 2, %s21
        %p218 = scmp.lt.s32.totalorder %s20, 1
        %s219 = scalar_select %p218, %s20, 1
        %p220 = scmp.lt.s32.totalorder %s217, 1
        %s221 = scalar_select %p220, %s217, 1
        %s222 = smul.addr %s219, 2
        %s223 = sadd.s32 %s221, %s222
        %s224 = smul.addr %s223, 4
        %s225 = scalar_lea.vmem %s0, %s224
        %s226 = smul.u32 2, %s21
        %s227 = smul.u32 2, %s21
        %p228 = scmp.lt.s32.totalorder %s20, 1
        %s229 = scalar_select %p228, %s20, 1
        %p230 = scmp.lt.s32.totalorder %s227, 1
        %s231 = scalar_select %p230, %s227, 1
        %s232 = smul.addr %s229, 2
        %s233 = sadd.s32 %s231, %s232
        %s234 = smul.addr %s233, 4
        %s235 = scalar_lea.vmem %s3, %s234
        %s236 = smul.u32 2, %s21
        %v237 = vld [vmem:[%s225] sm:$0xff]
        %s238 = sld [smem:[#allocation2]]
        %v239 = vstv %s238
        %v240 = vmul.f32 %v239, %v237
        %s241 = sld [smem:[#allocation2 + $0x1]]
        %v242 = vstv %s241
        %v243 = vmul.f32 %v242, %v237
        %v245 = vrot.slane %v243, 5
        %v246 = vrot.slane %v245, 4
        %v248 = vadd.f32 %v240, %v246
        %s249 = sld [smem:[#allocation2 + $0x2]]
        %v250 = vstv %s249
        %v251 = vmul.f32 %v250, %v237
        %v253 = vrot.slane %v251, 6
        %v254 = vrot.slane %v253, 4
        %v256 = vadd.f32 %v248, %v254
        %s257 = sld [smem:[#allocation2 + $0x3]]
        %v258 = vstv %s257
        %v259 = vmul.f32 %v258, %v237
        %v261 = vrot.slane %v259, 7
        %v262 = vrot.slane %v261, 4
        %v264 = vadd.f32 %v256, %v262
        %s265 = sld [smem:[#allocation4]]
        %v266 = vstv %s265
        %v267 = vadd.f32 %v264, %v266
        %v269 = vrot.slane %v267, 3
        %vm270 = vcmask 1040384
        %v271 = vsel %vm270, %v267, %v269
        %v273 = vlaneseq
        %vm274 = vcmp.ge.s32.totalorder %v273, 0
        %vm275 = vcmp.lt.s32.totalorder %v273, 256
        %vm276 = vmand %vm274, %vm275
        %277 = vst.msk [vmem:[%s235] ss:$4 sm:$0x3] %vm276, %v271
        %s278 = sld [smem:[#allocation2 + $0x80]]
        %v279 = vstv %s278
        %v280 = vmul.f32 %v279, %v237
        %s281 = sld [smem:[#allocation2 + $0x81]]
        %v282 = vstv %s281
        %v283 = vmul.f32 %v282, %v237
        %v285 = vrot.slane %v283, 5
        %v286 = vrot.slane %v285, 4
        %v288 = vadd.f32 %v280, %v286
        %s289 = sld [smem:[#allocation2 + $0x82]]
        %v290 = vstv %s289
        %v291 = vmul.f32 %v290, %v237
        %v293 = vrot.slane %v291, 6
        %v294 = vrot.slane %v293, 4
        %v296 = vadd.f32 %v288, %v294
        %s297 = sld [smem:[#allocation2 + $0x83]]
        %v298 = vstv %s297
        %v299 = vmul.f32 %v298, %v237
        %v301 = vrot.slane %v299, 7
        %v302 = vrot.slane %v301, 4
        %v304 = vadd.f32 %v296, %v302
        %s305 = sld [smem:[#allocation4 + $0x1]]
        %v306 = vstv %s305
        %v307 = vadd.f32 %v304, %v306
        %v309 = vrot.slane %v307, 3
        %v310 = vsel %vm270, %v307, %v309
        %s312 = scalar_lea.vmem %s235, 1
        %313 = vst.msk [vmem:[%s312] ss:$4 sm:$0x3] %vm276, %v310
        %s314 = sld [smem:[#allocation2 + $0x100]]
        %v315 = vstv %s314
        %v316 = vmul.f32 %v315, %v237
        %s317 = sld [smem:[#allocation2 + $0x101]]
        %v318 = vstv %s317
        %v319 = vmul.f32 %v318, %v237
        %v321 = vrot.slane %v319, 5
        %v322 = vrot.slane %v321, 4
        %v324 = vadd.f32 %v316, %v322
        %s325 = sld [smem:[#allocation2 + $0x102]]
        %v326 = vstv %s325
        %v327 = vmul.f32 %v326, %v237
        %v329 = vrot.slane %v327, 6
        %v330 = vrot.slane %v329, 4
        %v332 = vadd.f32 %v324, %v330
        %s333 = sld [smem:[#allocation2 + $0x103]]
        %v334 = vstv %s333
        %v335 = vmul.f32 %v334, %v237
        %v337 = vrot.slane %v335, 7
        %v338 = vrot.slane %v337, 4
        %v340 = vadd.f32 %v332, %v338
        %s341 = sld [smem:[#allocation4 + $0x2]]
        %v342 = vstv %s341
        %v343 = vadd.f32 %v340, %v342
        %v345 = vrot.slane %v343, 3
        %v346 = vsel %vm270, %v343, %v345
        %s348 = scalar_lea.vmem %s235, 2
        %349 = vst.msk [vmem:[%s348] ss:$4 sm:$0x3] %vm276, %v346
        %s350 = smul.u32 2, %s21
        %p351 = scmp.lt.s32.totalorder %s20, 1
        %s352 = scalar_select %p351, %s20, 1
        %p353 = scmp.lt.s32.totalorder %s350, 1
        %s354 = scalar_select %p353, %s350, 1
        %s355 = smul.addr %s352, 2
        %s356 = sadd.s32 %s354, %s355
        %s357 = smul.addr %s356, 4
        %s358 = scalar_lea.vmem %s3, %s357
        // Predicated region
        $region41: #{out_conv.1} parent=31 // pred_check
          %p359 = pneg %p118
        $region42: #{out_conv.1} parent=31 // pred_check_branch
          %361 = sbr.rel (%p359) target = $region44
        $region43: #{out_conv.1} parent=31 // pred_region
          %s362 = smul.u32 2, %s21
        $region44: #{out_conv.1} parent=31 // pred_fallthru
          _
      $region32: #{out_conv.1} parent=5 // pred_fallthru
        _
      %p363 = scmp.le.s32.totalorder 2, %s11
      // Predicated region
      $region45: #{out_conv.1} parent=5 // pred_check
        %p364 = pneg %p363
      $region46: #{out_conv.1} parent=5 // pred_check_branch
        %366 = sbr.rel (%p364) target = $region48
      $region47: #{out_conv.1} parent=5 // pred_region
        %s367 = ssub.s32 %s11, 2
        // Predicated region
        $region49: #{out_conv.1} parent=47 // pred_check
          %p368 = pneg %p124
        $region50: #{out_conv.1} parent=47 // pred_check_branch
          %370 = sbr.rel (%p368) target = $region52
        $region51: #{out_conv.1} parent=47 // pred_region
          %s371 = smul.u32 2, %s23
          %p372 = scmp.lt.s32.totalorder %s22, 1
          %s373 = scalar_select %p372, %s22, 1
          %p374 = scmp.lt.s32.totalorder %s371, 1
          %s375 = scalar_select %p374, %s371, 1
          %s376 = smul.addr %s373, 2
          %s377 = sadd.s32 %s375, %s376
          %s378 = smul.addr %s377, 4
          %s379 = scalar_lea.vmem %s3, %s378
        $region52: #{out_conv.1} parent=47 // pred_fallthru
          _
      $region48: #{out_conv.1} parent=5 // pred_fallthru
        _
    $region6: #{out_conv.1} parent=1 // loop_footer
      %s15 = sadd.s32 1, %s11
    $region7: #{out_conv.1} parent=1 // loop_footer_branch
      %10 = sbr.rel target = $region3
    $region8: #{out_conv.1} parent=1 // loop_exit
      _
    %380 = vsyncpa [#allocation3], 1
    %s381 = scalar_lea.sflag [#allocation3], 1
    %382 = vsyncpa %s381, 1
    %383 = vsyncpa [#allocation5], 1

</llo_original>
